<compile_context>
chip_gen: v6e
topology: v6e:2x2x1
jax: 0.10.0
libtpu: 0.0.40
codegen_flags: <defaults>
</compile_context>

<pallas_src>
import functools

import numpy as np
import jax
import jax.numpy as jnp
from jax.experimental import pallas as pl
from jax.experimental.pallas import tpu as pltpu


# ----------------------------------------------------------------------------
# Fused kernel (whole batch in one invocation):
#   t      = up_stacked @ KT                      # (N*Cup, HW), one MXU pass
#   out[n] = Wup @ t[n] + Wmain @ main[n] + bcomb # per-batch tiny GEMMs
# ----------------------------------------------------------------------------
def _fused_kernel(up_ref, main_ref, wup_ref, wmain_ref, bcomb_ref, kt_ref,
                  o_ref, *, n_batch, cup):
    # up_ref:    (N*Cup, HuWu)     main_ref:  (N, Cmain, HW)
    # wup_ref:   (Cmain, Cup)      wmain_ref: (Cmain, Cmain)
    # bcomb_ref: (Cmain, 1)        kt_ref:    (HuWu, HW)
    # o_ref:     (N, Cmain, HW)
    t = jnp.dot(up_ref[...], kt_ref[...],
                preferred_element_type=jnp.float32)          # (N*Cup, HW)
    wup = wup_ref[...]
    wmain = wmain_ref[...]
    bcomb = bcomb_ref[...]
    for n in range(n_batch):                                  # static unroll (N tiny)
        tn = t[n * cup:(n + 1) * cup, :]                      # (Cup, HW) static slice
        res = jnp.dot(wup, tn, preferred_element_type=jnp.float32)
        mc = jnp.dot(wmain, main_ref[n], preferred_element_type=jnp.float32)
        o_ref[n] = (res + mc + bcomb).astype(o_ref.dtype)


# ----------------------------------------------------------------------------
# PyTorch-matching bilinear x2 interpolation matrix (align_corners=False),
# rows cropped to `crop_to` (this folds the res[:, :, :H, :W] crop).
# ----------------------------------------------------------------------------
def _bilinear_matrix_np(in_size, crop_to):
    out_full = 2 * in_size
    dst = np.arange(out_full, dtype=np.float64)
    src = (dst + 0.5) * (in_size / out_full) - 0.5
    src = np.maximum(src, 0.0)                      # PyTorch clamps negative src
    i0 = np.minimum(np.floor(src).astype(np.int64), in_size - 1)
    i1 = np.minimum(i0 + 1, in_size - 1)
    frac = src - i0
    M = np.zeros((out_full, in_size), dtype=np.float32)
    M[np.arange(out_full), i0] += (1.0 - frac).astype(np.float32)
    M[np.arange(out_full), i1] += frac.astype(np.float32)
    return M[:crop_to]


@functools.lru_cache(maxsize=None)
def _upsample_kron_t(hu, wu, h, w):
    """KT = kron(Ih, Iw)^T so that (x_flat @ KT)[c, h*W+w] == (Ih @ x @ Iw^T)[h, w].

    Each row of kron(Ih, Iw) sums to 1 (bilinear partition of unity), hence each
    column of KT sums to 1 — this is what lets the up-conv bias be folded into
    the post-upsample combined bias.
    """
    ih = _bilinear_matrix_np(hu, h)                 # (H, Hu)
    iw = _bilinear_matrix_np(wu, w)                 # (W, Wu)
    k = np.kron(ih, iw)                             # (H*W, Hu*Wu)
    return jnp.asarray(np.ascontiguousarray(k.T))   # (Hu*Wu, H*W)


# ----------------------------------------------------------------------------
# ContextTexture forward (single fused, single-step pallas_call)
# ----------------------------------------------------------------------------
def context_texture_forward(up, main, params):
    """up: (N, up_ch, Hu, Wu), main: (N, main_ch, H, W) -> (N, main_ch, H, W)."""
    N, Cup, Hu, Wu = up.shape
    _, Cmain, H, W = main.shape
    HuWu, HW = Hu * Wu, H * W
    kt = _upsample_kron_t(Hu, Wu, H, W)             # (Hu*Wu, H*W), f32, cached

    # Free (contiguous) reshapes only — no transpose / pad / slice.
    up2 = up.reshape(N * Cup, HuWu)                 # batch stacked on M axis
    main3 = main.reshape(N, Cmain, HW)
    wup = params["up_w"]                            # (Cmain, Cup)
    wmain = params["main_w"]                        # (Cmain, Cmain)
    # Fold up-bias into combined bias (valid because KT columns sum to 1).
    bcomb = (params["up_b"] + params["main_b"]).reshape(Cmain, 1)

    flops = 2 * (N * Cup * HuWu * HW               # up @ KT
                 + N * Cmain * Cup * HW            # Wup @ t
                 + N * Cmain * Cmain * HW)         # Wmain @ main
    bytes_accessed = 4 * (up2.size + main3.size + wup.size + wmain.size
                          + bcomb.size + kt.size + N * Cmain * HW)

    out = pl.pallas_call(
        functools.partial(_fused_kernel, n_batch=N, cup=Cup),
        out_shape=jax.ShapeDtypeStruct((N, Cmain, HW), main.dtype),
        grid=(1,),
        in_specs=[
            pl.BlockSpec((N * Cup, HuWu), lambda i: (0, 0)),
            pl.BlockSpec((N, Cmain, HW), lambda i: (0, 0, 0)),
            pl.BlockSpec((Cmain, Cup), lambda i: (0, 0)),
            pl.BlockSpec((Cmain, Cmain), lambda i: (0, 0)),
            pl.BlockSpec((Cmain, 1), lambda i: (0, 0)),
            pl.BlockSpec((HuWu, HW), lambda i: (0, 0)),
        ],
        out_specs=pl.BlockSpec((N, Cmain, HW), lambda i: (0, 0, 0)),
        compiler_params=pltpu.CompilerParams(
            dimension_semantics=("arbitrary",)),
        cost_estimate=pl.CostEstimate(
            flops=flops, transcendentals=0, bytes_accessed=bytes_accessed),
    )(up2, main3, wup, wmain, bcomb, kt)

    return out.reshape(N, Cmain, H, W)


# ----------------------------------------------------------------------------
# Plain-JAX reference (separable Ih / Iw formulation) for a sanity check.
# ----------------------------------------------------------------------------
def reference_forward(up, main, params):
    def conv1x1(x, w, b):
        return jnp.einsum("nchw,oc->nohw", x, w) + b[None, :, None, None]

    up_c = conv1x1(up, params["up_w"], params["up_b"])
    main_c = conv1x1(main, params["main_w"], params["main_b"])
    _, _, Hu, Wu = up_c.shape
    _, _, H, W = main_c.shape
    ih = jnp.asarray(_bilinear_matrix_np(Hu, H))
    iw = jnp.asarray(_bilinear_matrix_np(Wu, W))
    res = jnp.einsum("hu,ncuv,wv->nchw", ih, up_c, iw)
    return res + main_c


if __name__ == "__main__":
    key = jax.random.PRNGKey(0)
    k1, k2, k3, k4, k5, k6 = jax.random.split(key, 6)

    up_ch, main_ch = 4, 8
    N = 2
    up = jax.random.normal(k1, (N, up_ch, 8, 8), dtype=jnp.float32)
    main = jax.random.normal(k2, (N, main_ch, 16, 16), dtype=jnp.float32)

    # 1x1 conv weights flattened to (Cout, Cin), biases (Cout,).
    params = {
        "up_w": jax.random.normal(k3, (main_ch, up_ch), dtype=jnp.float32) * 0.1,
        "up_b": jax.random.normal(k4, (main_ch,), dtype=jnp.float32) * 0.1,
        "main_w": jax.random.normal(k5, (main_ch, main_ch), dtype=jnp.float32) * 0.1,
        "main_b": jax.random.normal(k6, (main_ch,), dtype=jnp.float32) * 0.1,
    }

    out = jax.block_until_ready(context_texture_forward(up, main, params))
    ref = jax.block_until_ready(reference_forward(up, main, params))

    assert out.shape == (N, main_ch, 16, 16)
    np.testing.assert_allclose(np.asarray(out), np.asarray(ref), rtol=1e-5, atol=1e-5)

    print("KERNEL_OK")
</pallas_src>

<mosaic_0001>
module attributes {stable_mosaic.version = 11 : i64} {
  func.func @_fused_kernel(%arg0: i32, %arg1: memref<8x64xf32, #tpu.memory_space<vmem>>, %arg2: memref<2x8x256xf32, #tpu.memory_space<vmem>>, %arg3: memref<8x4xf32, #tpu.memory_space<vmem>>, %arg4: memref<8x8xf32, #tpu.memory_space<vmem>>, %arg5: memref<8x1xf32, #tpu.memory_space<vmem>>, %arg6: memref<64x256xf32, #tpu.memory_space<vmem>>, %arg7: memref<2x8x256xf32, #tpu.memory_space<vmem>>) attributes {dimension_semantics = [#tpu.dimension_semantics<arbitrary>], iteration_bounds = array<i64: 1>, scalar_prefetch = 0 : i64, scratch_operands = 0 : i64, tpu.core_type = #tpu.core_type<tc>, window_params = [{pipeline_mode = #tpu.pipeline_mode<synchronous>, transform_indices = @transform_0, window_bounds = array<i64: 8, 64>}, {pipeline_mode = #tpu.pipeline_mode<synchronous>, transform_indices = @transform_1, window_bounds = array<i64: 2, 8, 256>}, {pipeline_mode = #tpu.pipeline_mode<synchronous>, transform_indices = @transform_2, window_bounds = array<i64: 8, 4>}, {pipeline_mode = #tpu.pipeline_mode<synchronous>, transform_indices = @transform_3, window_bounds = array<i64: 8, 8>}, {pipeline_mode = #tpu.pipeline_mode<synchronous>, transform_indices = @transform_4, window_bounds = array<i64: 8, 1>}, {pipeline_mode = #tpu.pipeline_mode<synchronous>, transform_indices = @transform_5, window_bounds = array<i64: 64, 256>}, {pipeline_mode = #tpu.pipeline_mode<synchronous>, transform_indices = @transform_6, window_bounds = array<i64: 2, 8, 256>}]} {
    %c0 = arith.constant 0 : index
    %c0_0 = arith.constant 0 : index
    %0 = vector.load %arg1[%c0, %c0_0] : memref<8x64xf32, #tpu.memory_space<vmem>>, vector<8x64xf32>
    %c0_1 = arith.constant 0 : index
    %c0_2 = arith.constant 0 : index
    %1 = vector.load %arg6[%c0_1, %c0_2] : memref<64x256xf32, #tpu.memory_space<vmem>>, vector<64x256xf32>
    %cst = arith.constant dense<0.000000e+00> : vector<8x256xf32>
    %2 = tpu.matmul %0, %1, %cst {dimension_numbers = #tpu.dot_dimension_numbers<[1], [0], [0], [1], [0, 0, 1, 1], [], []>} : vector<8x64xf32>, vector<64x256xf32>, vector<8x256xf32> -> vector<8x256xf32>
    %c0_3 = arith.constant 0 : index
    %c0_4 = arith.constant 0 : index
    %3 = vector.load %arg3[%c0_3, %c0_4] : memref<8x4xf32, #tpu.memory_space<vmem>>, vector<8x4xf32>
    %c0_5 = arith.constant 0 : index
    %c0_6 = arith.constant 0 : index
    %4 = vector.load %arg4[%c0_5, %c0_6] : memref<8x8xf32, #tpu.memory_space<vmem>>, vector<8x8xf32>
    %c0_7 = arith.constant 0 : index
    %c0_8 = arith.constant 0 : index
    %5 = vector.load %arg5[%c0_7, %c0_8] : memref<8x1xf32, #tpu.memory_space<vmem>>, vector<8x1xf32>
    %6 = vector.extract_strided_slice %2 {offsets = [0, 0], sizes = [4, 256], strides = [1, 1]} : vector<8x256xf32> to vector<4x256xf32>
    %cst_9 = arith.constant dense<0.000000e+00> : vector<8x256xf32>
    %7 = tpu.matmul %3, %6, %cst_9 {dimension_numbers = #tpu.dot_dimension_numbers<[1], [0], [0], [1], [0, 0, 1, 1], [], []>} : vector<8x4xf32>, vector<4x256xf32>, vector<8x256xf32> -> vector<8x256xf32>
    %c0_10 = arith.constant 0 : index
    %c0_11 = arith.constant 0 : index
    %c0_12 = arith.constant 0 : index
    %8 = vector.load %arg2[%c0_10, %c0_11, %c0_12] : memref<2x8x256xf32, #tpu.memory_space<vmem>>, vector<1x8x256xf32>
    %9 = vector.shape_cast %8 : vector<1x8x256xf32> to vector<8x256xf32>
    %cst_13 = arith.constant dense<0.000000e+00> : vector<8x256xf32>
    %10 = tpu.matmul %4, %9, %cst_13 {dimension_numbers = #tpu.dot_dimension_numbers<[1], [0], [0], [1], [0, 0, 1, 1], [], []>} : vector<8x8xf32>, vector<8x256xf32>, vector<8x256xf32> -> vector<8x256xf32>
    %11 = arith.addf %7, %10 : vector<8x256xf32>
    %12 = vector.broadcast %5 : vector<8x1xf32> to vector<8x256xf32>
    %13 = arith.addf %11, %12 : vector<8x256xf32>
    %c0_14 = arith.constant 0 : index
    %c0_15 = arith.constant 0 : index
    %c0_16 = arith.constant 0 : index
    %14 = vector.load %arg7[%c0_14, %c0_15, %c0_16] : memref<2x8x256xf32, #tpu.memory_space<vmem>>, vector<1x8x256xf32>
    %15 = vector.shape_cast %14 : vector<1x8x256xf32> to vector<8x256xf32>
    %16 = vector.shape_cast %13 : vector<8x256xf32> to vector<1x8x256xf32>
    tpu.vector_store %arg7[%c0_14, %c0_15, %c0_16], %16 {strides = array<i32>} : memref<2x8x256xf32, #tpu.memory_space<vmem>>, vector<1x8x256xf32>,
    %17 = vector.extract_strided_slice %2 {offsets = [4, 0], sizes = [4, 256], strides = [1, 1]} : vector<8x256xf32> to vector<4x256xf32>
    %cst_17 = arith.constant dense<0.000000e+00> : vector<8x256xf32>
    %18 = tpu.matmul %3, %17, %cst_17 {dimension_numbers = #tpu.dot_dimension_numbers<[1], [0], [0], [1], [0, 0, 1, 1], [], []>} : vector<8x4xf32>, vector<4x256xf32>, vector<8x256xf32> -> vector<8x256xf32>
    %c1 = arith.constant 1 : index
    %c0_18 = arith.constant 0 : index
    %c0_19 = arith.constant 0 : index
    %19 = vector.load %arg2[%c1, %c0_18, %c0_19] : memref<2x8x256xf32, #tpu.memory_space<vmem>>, vector<1x8x256xf32>
    %20 = vector.shape_cast %19 : vector<1x8x256xf32> to vector<8x256xf32>
    %cst_20 = arith.constant dense<0.000000e+00> : vector<8x256xf32>
    %21 = tpu.matmul %4, %20, %cst_20 {dimension_numbers = #tpu.dot_dimension_numbers<[1], [0], [0], [1], [0, 0, 1, 1], [], []>} : vector<8x8xf32>, vector<8x256xf32>, vector<8x256xf32> -> vector<8x256xf32>
    %22 = arith.addf %18, %21 : vector<8x256xf32>
    %23 = vector.broadcast %5 : vector<8x1xf32> to vector<8x256xf32>
    %24 = arith.addf %22, %23 : vector<8x256xf32>
    %c1_21 = arith.constant 1 : index
    %c0_22 = arith.constant 0 : index
    %c0_23 = arith.constant 0 : index
    %25 = vector.load %arg7[%c1_21, %c0_22, %c0_23] : memref<2x8x256xf32, #tpu.memory_space<vmem>>, vector<1x8x256xf32>
    %26 = vector.shape_cast %25 : vector<1x8x256xf32> to vector<8x256xf32>
    %27 = vector.shape_cast %24 : vector<8x256xf32> to vector<1x8x256xf32>
    tpu.vector_store %arg7[%c1_21, %c0_22, %c0_23], %27 {strides = array<i32>} : memref<2x8x256xf32, #tpu.memory_space<vmem>>, vector<1x8x256xf32>,
    return
  }
  func.func @transform_0(%arg0: i32) -> (i32, i32) {
    %c0_i32 = arith.constant 0 : i32
    %c0_i32_0 = arith.constant 0 : i32
    %c0_i32_1 = arith.constant 0 : i32
    return %c0_i32, %c0_i32_0 : i32, i32
  }
  func.func @transform_1(%arg0: i32) -> (i32, i32, i32) {
    %c0_i32 = arith.constant 0 : i32
    %c0_i32_0 = arith.constant 0 : i32
    %c0_i32_1 = arith.constant 0 : i32
    %c0_i32_2 = arith.constant 0 : i32
    return %c0_i32, %c0_i32_0, %c0_i32_1 : i32, i32, i32
  }
  func.func @transform_2(%arg0: i32) -> (i32, i32) {
    %c0_i32 = arith.constant 0 : i32
    %c0_i32_0 = arith.constant 0 : i32
    %c0_i32_1 = arith.constant 0 : i32
    return %c0_i32, %c0_i32_0 : i32, i32
  }
  func.func @transform_3(%arg0: i32) -> (i32, i32) {
    %c0_i32 = arith.constant 0 : i32
    %c0_i32_0 = arith.constant 0 : i32
    %c0_i32_1 = arith.constant 0 : i32
    return %c0_i32, %c0_i32_0 : i32, i32
  }
  func.func @transform_4(%arg0: i32) -> (i32, i32) {
    %c0_i32 = arith.constant 0 : i32
    %c0_i32_0 = arith.constant 0 : i32
    %c0_i32_1 = arith.constant 0 : i32
    return %c0_i32, %c0_i32_0 : i32, i32
  }
  func.func @transform_5(%arg0: i32) -> (i32, i32) {
    %c0_i32 = arith.constant 0 : i32
    %c0_i32_0 = arith.constant 0 : i32
    %c0_i32_1 = arith.constant 0 : i32
    return %c0_i32, %c0_i32_0 : i32, i32
  }
  func.func @transform_6(%arg0: i32) -> (i32, i32, i32) {
    %c0_i32 = arith.constant 0 : i32
    %c0_i32_0 = arith.constant 0 : i32
    %c0_i32_1 = arith.constant 0 : i32
    %c0_i32_2 = arith.constant 0 : i32
    return %c0_i32, %c0_i32_0, %c0_i32_1 : i32, i32, i32
  }
}

</mosaic_0001>

<llo_original>
// kernel: tpu_custom_call.1
$region0: #{tpu_custom_call.1}
  #allocation0 [shape = 'u32[]', space=smem, size = 0x4, offset = 0x4, fixed_abs, tag = 'smem constant byte address 0x4 - core index']
  #allocation1 [shape = 'u32[144,128]{1,0:T(1,128)}', space=vmem, size = 0x12000, scoped, tag = 'internal scratch']
  %s0 = inlined_call_operand.vmem [shape: f32[8,64], index: 0, kind: input, shape index: {}]
  %s1 = inlined_call_operand.hbm [shape: f32[2,8,256], index: 1, kind: input, shape index: {}]
  %s2 = inlined_call_operand.vmem [shape: f32[8,4], index: 2, kind: input, shape index: {}]
  %s3 = inlined_call_operand.vmem [shape: f32[8,8], index: 3, kind: input, shape index: {}]
  %s4 = inlined_call_operand.vmem [shape: f32[8,1], index: 4, kind: input, shape index: {}]
  %s5 = inlined_call_operand.hbm [shape: f32[64,256], index: 5, kind: input, shape index: {}]
  %s6 = inlined_call_operand.hbm [shape: f32[2,8,256], index: 6, kind: output, shape index: {}]
  %s7 = sld [smem:[#allocation0]]
  $region42: #{tpu_custom_call.1} parent=0
    _
  %s9 = ssub.s32 1, %s7
  %s10 = scalar_select 0, %s9, %s7
  $region1: #{tpu_custom_call.1} parent=0
    #allocation2 [shape = 'u8[16384]{0}', space=vmem, size = 0x4000, scoped, tag = 'input window, operand 1, single buffered']
    #allocation3 [shape = 's32[1]{0}', space=sflag, size = 0x4, scoped, tag = 'scoped memory for tpu_custom_call.1']
    #allocation4 [shape = 's32[1]{0}', space=sflag, size = 0x4, scoped, tag = 'scoped memory for tpu_custom_call.1']
    #allocation5 [shape = 'u8[65536]{0}', space=vmem, size = 0x10000, scoped, tag = 'input window, operand 5, single buffered']
    #allocation6 [shape = 's32[1]{0}', space=sflag, size = 0x4, scoped, tag = 'scoped memory for tpu_custom_call.1']
    #allocation7 [shape = 'u8[16384]{0}', space=vmem, size = 0x4000, scoped, tag = 'output window, operand 0, single buffered']
    %11 = vsyncpa [#allocation3], 0
    %12 = vsyncpa [#allocation6], 0
    %13 = vsyncpa [#allocation4], 0
    // Predicated region
    $region2: #{tpu_custom_call.1} parent=1 // pred_check
      _
    $region3: #{tpu_custom_call.1} parent=1 // pred_check_branch
      %15 = sbr.rel (0) target = $region5
    $region4: #{tpu_custom_call.1} parent=1 // pred_region
      _
    $region5: #{tpu_custom_call.1} parent=1 // pred_fallthru
      _
    // Predicated region
    $region6: #{tpu_custom_call.1} parent=1 // pred_check
      _
    $region7: #{tpu_custom_call.1} parent=1 // pred_check_branch
      %17 = sbr.rel (0) target = $region9
    $region8: #{tpu_custom_call.1} parent=1 // pred_region
      %s19 = ssub.s32 512, 512
      %20 = vsyncadd [#allocation3], %s19
      %s21 = sshll.u32 [#allocation2], 4
      %s22 = int_to_ptr.vmem [resolvable:$true] %s21
      %27 = dma.hbm_to_vmem [thread:$0]  %s1, 512, %s22, [#allocation3], 256, 256, 16
    $region9: #{tpu_custom_call.1} parent=1 // pred_fallthru
      _
    // Predicated region
    $region10: #{tpu_custom_call.1} parent=1 // pred_check
      _
    $region11: #{tpu_custom_call.1} parent=1 // pred_check_branch
      %29 = sbr.rel (0) target = $region13
    $region12: #{tpu_custom_call.1} parent=1 // pred_region
      _
    $region13: #{tpu_custom_call.1} parent=1 // pred_fallthru
      _
    // Predicated region
    $region14: #{tpu_custom_call.1} parent=1 // pred_check
      _
    $region15: #{tpu_custom_call.1} parent=1 // pred_check_branch
      %31 = sbr.rel (0) target = $region17
    $region16: #{tpu_custom_call.1} parent=1 // pred_region
      _
    $region17: #{tpu_custom_call.1} parent=1 // pred_fallthru
      _
    // Predicated region
    $region18: #{tpu_custom_call.1} parent=1 // pred_check
      _
    $region19: #{tpu_custom_call.1} parent=1 // pred_check_branch
      %33 = sbr.rel (0) target = $region21
    $region20: #{tpu_custom_call.1} parent=1 // pred_region
      _
    $region21: #{tpu_custom_call.1} parent=1 // pred_fallthru
      _
    // Predicated region
    $region22: #{tpu_custom_call.1} parent=1 // pred_check
      _
    $region23: #{tpu_custom_call.1} parent=1 // pred_check_branch
      %35 = sbr.rel (0) target = $region25
    $region24: #{tpu_custom_call.1} parent=1 // pred_region
      %s37 = ssub.s32 2048, 2048
      %38 = vsyncadd [#allocation6], %s37
      %s39 = sshll.u32 [#allocation5], 4
      %s40 = int_to_ptr.vmem [resolvable:$true] %s39
      %45 = dma.hbm_to_vmem [thread:$0]  %s5, 2048, %s40, [#allocation6], 256, 256, 16
    $region25: #{tpu_custom_call.1} parent=1 // pred_fallthru
      _
    // Predicated region
    $region26: #{tpu_custom_call.1} parent=1 // pred_check
      _
    $region27: #{tpu_custom_call.1} parent=1 // pred_check_branch
      %47 = sbr.rel (0) target = $region29
    $region28: #{tpu_custom_call.1} parent=1 // pred_region
      %48 = dma.done [#allocation3], 512
    $region29: #{tpu_custom_call.1} parent=1 // pred_fallthru
      _
    // Predicated region
    $region30: #{tpu_custom_call.1} parent=1 // pred_check
      _
    $region31: #{tpu_custom_call.1} parent=1 // pred_check_branch
      %50 = sbr.rel (0) target = $region33
    $region32: #{tpu_custom_call.1} parent=1 // pred_region
      %51 = dma.done [#allocation6], 2048
    $region33: #{tpu_custom_call.1} parent=1 // pred_fallthru
      _
    %v52 = vld [vmem:[%s0] sm:$0xff]
    %v53 = vld [vmem:[#allocation5] sm:$0xff]
    %v54 = vld [vmem:[#allocation5 + $0x8] sm:$0xff]
    %v55 = vld [vmem:[#allocation5 + $0x10] sm:$0xff]
    %v56 = vld [vmem:[#allocation5 + $0x18] sm:$0xff]
    %v57 = vld [vmem:[#allocation5 + $0x20] sm:$0xff]
    %v58 = vld [vmem:[#allocation5 + $0x28] sm:$0xff]
    %v59 = vld [vmem:[#allocation5 + $0x30] sm:$0xff]
    %v60 = vld [vmem:[#allocation5 + $0x38] sm:$0xff]
    %v61 = vld [vmem:[#allocation5 + $0x40] sm:$0xff]
    %v62 = vld [vmem:[#allocation5 + $0x48] sm:$0xff]
    %v63 = vld [vmem:[#allocation5 + $0x50] sm:$0xff]
    %v64 = vld [vmem:[#allocation5 + $0x58] sm:$0xff]
    %v65 = vld [vmem:[#allocation5 + $0x60] sm:$0xff]
    %v66 = vld [vmem:[#allocation5 + $0x68] sm:$0xff]
    %v67 = vld [vmem:[#allocation5 + $0x70] sm:$0xff]
    %v68 = vld [vmem:[#allocation5 + $0x78] sm:$0xff]
    %vm69 = vcmask 523264
    %v71 = vsel %vm69, %v52, 0
    %73 = vmatprep.subr.mxu0 0.0
    %74 = vmatpush1.msra.mxu0 0.0
    %75 = vmatprep.subr.mxu0 0.0
    %76 = vmatpush1.msra.mxu0 0.0
    %77 = vmatprep.subr.mxu0 0.0
    %78 = vmatpush1.msra.mxu0 0.0
    %79 = vmatprep.subr.mxu0 0.0
    %80 = vmatpush1.msra.mxu0 0.0
    %81 = vmatprep.subr.mxu0 0.0
    %82 = vmatpush1.msra.mxu0 0.0
    %83 = vmatprep.subr.mxu0 0.0
    %84 = vmatpush1.msra.mxu0 0.0
    %85 = vmatprep.subr.mxu0 0.0
    %86 = vmatpush1.msra.mxu0 0.0
    %87 = vmatprep.subr.mxu0 0.0
    %88 = vmatpush1.msra.mxu0 0.0
    %89 = vmatprep.subr.mxu0 %v68
    %90 = vmatpush1.msra.mxu0 %v67
    %91 = vmatprep.subr.mxu0 %v66
    %92 = vmatpush1.msra.mxu0 %v65
    %93 = vmatprep.subr.mxu0 %v64
    %94 = vmatpush1.msra.mxu0 %v63
    %95 = vmatprep.subr.mxu0 %v62
    %96 = vmatpush1.msra.mxu0 %v61
    %97 = vmatprep.subr.mxu0 %v60
    %98 = vmatpush1.msra.mxu0 %v59
    %99 = vmatprep.subr.mxu0 %v58
    %100 = vmatpush1.msra.mxu0 %v57
    %101 = vmatprep.subr.mxu0 %v56
    %102 = vmatpush1.msra.mxu0 %v55
    %103 = vmatprep.subr.mxu0 %v54
    %104 = vmatpush1.msra.mxu0 %v53
    %105 = vmatprep.subr.mxu0 0.0
    %106 = vmatpush2.msra.mxu0 0.0
    %107 = vmatprep.subr.mxu0 0.0
    %108 = vmatpush2.msra.mxu0 0.0
    %109 = vmatprep.subr.mxu0 0.0
    %110 = vmatpush2.msra.mxu0 0.0
    %111 = vmatprep.subr.mxu0 0.0
    %112 = vmatpush2.msra.mxu0 0.0
    %113 = vmatprep.subr.mxu0 0.0
    %114 = vmatpush2.msra.mxu0 0.0
    %115 = vmatprep.subr.mxu0 0.0
    %116 = vmatpush2.msra.mxu0 0.0
    %117 = vmatprep.subr.mxu0 0.0
    %118 = vmatpush2.msra.mxu0 0.0
    %119 = vmatprep.subr.mxu0 0.0
    %120 = vmatpush2.msra.mxu0 0.0
    %121 = vmatprep.subr.mxu0 0.0
    %122 = vmatpush2.msra.mxu0 0.0
    %123 = vmatprep.subr.mxu0 0.0
    %124 = vmatpush2.msra.mxu0 0.0
    %125 = vmatprep.subr.mxu0 0.0
    %126 = vmatpush2.msra.mxu0 0.0
    %127 = vmatprep.subr.mxu0 0.0
    %128 = vmatpush2.msra.mxu0 0.0
    %129 = vmatprep.subr.mxu0 0.0
    %130 = vmatpush2.msra.mxu0 0.0
    %131 = vmatprep.subr.mxu0 0.0
    %132 = vmatpush2.msra.mxu0 0.0
    %133 = vmatprep.subr.mxu0 0.0
    %134 = vmatpush2.msra.mxu0 0.0
    %135 = vmatprep.subr.mxu0 0.0
    %136 = vmatpush2.msra.mxu0 0.0
    %137 = vmatprep.mubr.f32.mxu0 0.0
    %138 = vmatmul.mubr.f32.gmra.mxu0 %v71
    %v139 = vpop.f32.mrf.mxu0
    %v140 = vadd.f32 0.0, %v139
    %v141 = vpop.f32.mrf.mxu0
    %v142 = vadd.f32 0.0, %v141
    %143 = vdwg.mxu0
    %v144 = vld [vmem:[%s2] sm:$0xff]
    %v145 = vld [vmem:[%s3] sm:$0xff]
    %v146 = vld [vmem:[%s4] sm:$0xff]
    %v147 = vld [vmem:[#allocation2] sm:$0xff]
    %v148 = vld [vmem:[#allocation2 + $0x8] sm:$0xff]
    %vm149 = vcmask 64512
    %v151 = vsel %vm149, %v145, 0
    %153 = vmatprep.subr.mxu0 0.0
    %154 = vmatpush1.msra.mxu0 0.0
    %155 = vmatprep.subr.mxu0 0.0
    %156 = vmatpush1.msra.mxu0 0.0
    %157 = vmatprep.subr.mxu0 0.0
    %158 = vmatpush1.msra.mxu0 0.0
    %159 = vmatprep.subr.mxu0 0.0
    %160 = vmatpush1.msra.mxu0 0.0
    %161 = vmatprep.subr.mxu0 0.0
    %162 = vmatpush1.msra.mxu0 0.0
    %163 = vmatprep.subr.mxu0 0.0
    %164 = vmatpush1.msra.mxu0 0.0
    %165 = vmatprep.subr.mxu0 0.0
    %166 = vmatpush1.msra.mxu0 0.0
    %167 = vmatprep.subr.mxu0 0.0
    %168 = vmatpush1.msra.mxu0 0.0
    %169 = vmatprep.subr.mxu0 0.0
    %170 = vmatpush1.msra.mxu0 0.0
    %171 = vmatprep.subr.mxu0 0.0
    %172 = vmatpush1.msra.mxu0 0.0
    %173 = vmatprep.subr.mxu0 0.0
    %174 = vmatpush1.msra.mxu0 0.0
    %175 = vmatprep.subr.mxu0 0.0
    %176 = vmatpush1.msra.mxu0 0.0
    %177 = vmatprep.subr.mxu0 0.0
    %178 = vmatpush1.msra.mxu0 0.0
    %179 = vmatprep.subr.mxu0 0.0
    %180 = vmatpush1.msra.mxu0 0.0
    %181 = vmatprep.subr.mxu0 0.0
    %182 = vmatpush1.msra.mxu0 0.0
    %183 = vmatprep.subr.mxu0 %v148
    %184 = vmatpush1.msra.mxu0 %v147
    %185 = vmatprep.subr.mxu0 0.0
    %186 = vmatpush2.msra.mxu0 0.0
    %187 = vmatprep.subr.mxu0 0.0
    %188 = vmatpush2.msra.mxu0 0.0
    %189 = vmatprep.subr.mxu0 0.0
    %190 = vmatpush2.msra.mxu0 0.0
    %191 = vmatprep.subr.mxu0 0.0
    %192 = vmatpush2.msra.mxu0 0.0
    %193 = vmatprep.subr.mxu0 0.0
    %194 = vmatpush2.msra.mxu0 0.0
    %195 = vmatprep.subr.mxu0 0.0
    %196 = vmatpush2.msra.mxu0 0.0
    %197 = vmatprep.subr.mxu0 0.0
    %198 = vmatpush2.msra.mxu0 0.0
    %199 = vmatprep.subr.mxu0 0.0
    %200 = vmatpush2.msra.mxu0 0.0
    %201 = vmatprep.subr.mxu0 0.0
    %202 = vmatpush2.msra.mxu0 0.0
    %203 = vmatprep.subr.mxu0 0.0
    %204 = vmatpush2.msra.mxu0 0.0
    %205 = vmatprep.subr.mxu0 0.0
    %206 = vmatpush2.msra.mxu0 0.0
    %207 = vmatprep.subr.mxu0 0.0
    %208 = vmatpush2.msra.mxu0 0.0
    %209 = vmatprep.subr.mxu0 0.0
    %210 = vmatpush2.msra.mxu0 0.0
    %211 = vmatprep.subr.mxu0 0.0
    %212 = vmatpush2.msra.mxu0 0.0
    %213 = vmatprep.subr.mxu0 0.0
    %214 = vmatpush2.msra.mxu0 0.0
    %215 = vmatprep.subr.mxu0 0.0
    %216 = vmatpush2.msra.mxu0 0.0
    %217 = vmatprep.mubr.f32.mxu0 0.0
    %218 = vmatmul.mubr.f32.gmra.mxu0 %v151
    %v219 = vpop.f32.mrf.mxu0
    %v220 = vadd.f32 0.0, %v219
    %v221 = vpop.f32.mrf.mxu0
    %v222 = vadd.f32 0.0, %v221
    %223 = vdwg.mxu0
    %vm224 = vcmask 31744
    %v226 = vsel %vm224, %v144, 0
    %vm228 = vcmask 1043456
    %v230 = vsel %vm228, %v140, 0
    %v233 = vsel %vm228, %v142, 0
    %235 = vmatprep.subr.mxu0 0.0
    %236 = vmatpush1.msra.mxu0 0.0
    %237 = vmatprep.subr.mxu0 0.0
    %238 = vmatpush1.msra.mxu0 0.0
    %239 = vmatprep.subr.mxu0 0.0
    %240 = vmatpush1.msra.mxu0 0.0
    %241 = vmatprep.subr.mxu0 0.0
    %242 = vmatpush1.msra.mxu0 0.0
    %243 = vmatprep.subr.mxu0 0.0
    %244 = vmatpush1.msra.mxu0 0.0
    %245 = vmatprep.subr.mxu0 0.0
    %246 = vmatpush1.msra.mxu0 0.0
    %247 = vmatprep.subr.mxu0 0.0
    %248 = vmatpush1.msra.mxu0 0.0
    %249 = vmatprep.subr.mxu0 0.0
    %250 = vmatpush1.msra.mxu0 0.0
    %251 = vmatprep.subr.mxu0 0.0
    %252 = vmatpush1.msra.mxu0 0.0
    %253 = vmatprep.subr.mxu0 0.0
    %254 = vmatpush1.msra.mxu0 0.0
    %255 = vmatprep.subr.mxu0 0.0
    %256 = vmatpush1.msra.mxu0 0.0
    %257 = vmatprep.subr.mxu0 0.0
    %258 = vmatpush1.msra.mxu0 0.0
    %259 = vmatprep.subr.mxu0 0.0
    %260 = vmatpush1.msra.mxu0 0.0
    %261 = vmatprep.subr.mxu0 0.0
    %262 = vmatpush1.msra.mxu0 0.0
    %263 = vmatprep.subr.mxu0 0.0
    %264 = vmatpush1.msra.mxu0 0.0
    %265 = vmatprep.subr.mxu0 %v233
    %266 = vmatpush1.msra.mxu0 %v230
    %267 = vmatprep.subr.mxu0 0.0
    %268 = vmatpush2.msra.mxu0 0.0
    %269 = vmatprep.subr.mxu0 0.0
    %270 = vmatpush2.msra.mxu0 0.0
    %271 = vmatprep.subr.mxu0 0.0
    %272 = vmatpush2.msra.mxu0 0.0
    %273 = vmatprep.subr.mxu0 0.0
    %274 = vmatpush2.msra.mxu0 0.0
    %275 = vmatprep.subr.mxu0 0.0
    %276 = vmatpush2.msra.mxu0 0.0
    %277 = vmatprep.subr.mxu0 0.0
    %278 = vmatpush2.msra.mxu0 0.0
    %279 = vmatprep.subr.mxu0 0.0
    %280 = vmatpush2.msra.mxu0 0.0
    %281 = vmatprep.subr.mxu0 0.0
    %282 = vmatpush2.msra.mxu0 0.0
    %283 = vmatprep.subr.mxu0 0.0
    %284 = vmatpush2.msra.mxu0 0.0
    %285 = vmatprep.subr.mxu0 0.0
    %286 = vmatpush2.msra.mxu0 0.0
    %287 = vmatprep.subr.mxu0 0.0
    %288 = vmatpush2.msra.mxu0 0.0
    %289 = vmatprep.subr.mxu0 0.0
    %290 = vmatpush2.msra.mxu0 0.0
    %291 = vmatprep.subr.mxu0 0.0
    %292 = vmatpush2.msra.mxu0 0.0
    %293 = vmatprep.subr.mxu0 0.0
    %294 = vmatpush2.msra.mxu0 0.0
    %295 = vmatprep.subr.mxu0 0.0
    %296 = vmatpush2.msra.mxu0 0.0
    %297 = vmatprep.subr.mxu0 0.0
    %298 = vmatpush2.msra.mxu0 0.0
    %299 = vmatprep.mubr.f32.mxu0 0.0
    %300 = vmatmul.mubr.f32.gmra.mxu0 %v226
    %v301 = vpop.f32.mrf.mxu0
    %v302 = vadd.f32 %v220, %v301
    %v303 = vpop.f32.mrf.mxu0
    %v304 = vadd.f32 %v222, %v303
    %305 = vdwg.mxu0
    %307 = vset.pattern.permute.xlu0 0
    %308 = vperm.xlu0 %307, %v146
    %v309 = vpop.permute.xlu0 %308
    %v311 = vadd.f32 %v302, %v309
    %v312 = vadd.f32 %v304, %v309
    %313 = vst [vmem:[#allocation7] sm:$0xff] %v311
    %314 = vst [vmem:[#allocation7 + $0x8] sm:$0xff] %v312
    %s315 = scalar_lea.vmem [#allocation2], 16
    %v316 = vld [vmem:[%s315] sm:$0xff]
    %v317 = vld [vmem:[%s315 + $0x8] sm:$0xff]
    %318 = vmatprep.subr.mxu0 0.0
    %319 = vmatpush1.msra.mxu0 0.0
    %320 = vmatprep.subr.mxu0 0.0
    %321 = vmatpush1.msra.mxu0 0.0
    %322 = vmatprep.subr.mxu0 0.0
    %323 = vmatpush1.msra.mxu0 0.0
    %324 = vmatprep.subr.mxu0 0.0
    %325 = vmatpush1.msra.mxu0 0.0
    %326 = vmatprep.subr.mxu0 0.0
    %327 = vmatpush1.msra.mxu0 0.0
    %328 = vmatprep.subr.mxu0 0.0
    %329 = vmatpush1.msra.mxu0 0.0
    %330 = vmatprep.subr.mxu0 0.0
    %331 = vmatpush1.msra.mxu0 0.0
    %332 = vmatprep.subr.mxu0 0.0
    %333 = vmatpush1.msra.mxu0 0.0
    %334 = vmatprep.subr.mxu0 0.0
    %335 = vmatpush1.msra.mxu0 0.0
    %336 = vmatprep.subr.mxu0 0.0
    %337 = vmatpush1.msra.mxu0 0.0
    %338 = vmatprep.subr.mxu0 0.0
    %339 = vmatpush1.msra.mxu0 0.0
    %340 = vmatprep.subr.mxu0 0.0
    %341 = vmatpush1.msra.mxu0 0.0
    %342 = vmatprep.subr.mxu0 0.0
    %343 = vmatpush1.msra.mxu0 0.0
    %344 = vmatprep.subr.mxu0 0.0
    %345 = vmatpush1.msra.mxu0 0.0
    %346 = vmatprep.subr.mxu0 0.0
    %347 = vmatpush1.msra.mxu0 0.0
    %348 = vmatprep.subr.mxu0 %v317
    %349 = vmatpush1.msra.mxu0 %v316
    %350 = vmatprep.subr.mxu0 0.0
    %351 = vmatpush2.msra.mxu0 0.0
    %352 = vmatprep.subr.mxu0 0.0
    %353 = vmatpush2.msra.mxu0 0.0
    %354 = vmatprep.subr.mxu0 0.0
    %355 = vmatpush2.msra.mxu0 0.0
    %356 = vmatprep.subr.mxu0 0.0
    %357 = vmatpush2.msra.mxu0 0.0
    %358 = vmatprep.subr.mxu0 0.0
    %359 = vmatpush2.msra.mxu0 0.0
    %360 = vmatprep.subr.mxu0 0.0
    %361 = vmatpush2.msra.mxu0 0.0
    %362 = vmatprep.subr.mxu0 0.0
    %363 = vmatpush2.msra.mxu0 0.0
    %364 = vmatprep.subr.mxu0 0.0
    %365 = vmatpush2.msra.mxu0 0.0
    %366 = vmatprep.subr.mxu0 0.0
    %367 = vmatpush2.msra.mxu0 0.0
    %368 = vmatprep.subr.mxu0 0.0
    %369 = vmatpush2.msra.mxu0 0.0
    %370 = vmatprep.subr.mxu0 0.0
    %371 = vmatpush2.msra.mxu0 0.0
    %372 = vmatprep.subr.mxu0 0.0
    %373 = vmatpush2.msra.mxu0 0.0
    %374 = vmatprep.subr.mxu0 0.0
    %375 = vmatpush2.msra.mxu0 0.0
    %376 = vmatprep.subr.mxu0 0.0
    %377 = vmatpush2.msra.mxu0 0.0
    %378 = vmatprep.subr.mxu0 0.0
    %379 = vmatpush2.msra.mxu0 0.0
    %380 = vmatprep.subr.mxu0 0.0
    %381 = vmatpush2.msra.mxu0 0.0
    %382 = vmatprep.mubr.f32.mxu0 0.0
    %383 = vmatmul.mubr.f32.gmra.mxu0 %v151
    %v384 = vpop.f32.mrf.mxu0
    %v385 = vadd.f32 0.0, %v384
    %v386 = vpop.f32.mrf.mxu0
    %v387 = vadd.f32 0.0, %v386
    %388 = vdwg.mxu0
    %v389 = vrot.slane %v140, 4
    %v390 = vrot.slane %v142, 4
    %v391 = vsel %vm228, %v389, 0
    %v393 = vsel %vm228, %v390, 0
    %395 = vmatprep.subr.mxu0 0.0
    %396 = vmatpush1.msra.mxu0 0.0
    %397 = vmatprep.subr.mxu0 0.0
    %398 = vmatpush1.msra.mxu0 0.0
    %399 = vmatprep.subr.mxu0 0.0
    %400 = vmatpush1.msra.mxu0 0.0
    %401 = vmatprep.subr.mxu0 0.0
    %402 = vmatpush1.msra.mxu0 0.0
    %403 = vmatprep.subr.mxu0 0.0
    %404 = vmatpush1.msra.mxu0 0.0
    %405 = vmatprep.subr.mxu0 0.0
    %406 = vmatpush1.msra.mxu0 0.0
    %407 = vmatprep.subr.mxu0 0.0
    %408 = vmatpush1.msra.mxu0 0.0
    %409 = vmatprep.subr.mxu0 0.0
    %410 = vmatpush1.msra.mxu0 0.0
    %411 = vmatprep.subr.mxu0 0.0
    %412 = vmatpush1.msra.mxu0 0.0
    %413 = vmatprep.subr.mxu0 0.0
    %414 = vmatpush1.msra.mxu0 0.0
    %415 = vmatprep.subr.mxu0 0.0
    %416 = vmatpush1.msra.mxu0 0.0
    %417 = vmatprep.subr.mxu0 0.0
    %418 = vmatpush1.msra.mxu0 0.0
    %419 = vmatprep.subr.mxu0 0.0
    %420 = vmatpush1.msra.mxu0 0.0
    %421 = vmatprep.subr.mxu0 0.0
    %422 = vmatpush1.msra.mxu0 0.0
    %423 = vmatprep.subr.mxu0 0.0
    %424 = vmatpush1.msra.mxu0 0.0
    %425 = vmatprep.subr.mxu0 %v393
    %426 = vmatpush1.msra.mxu0 %v391
    %427 = vmatprep.subr.mxu0 0.0
    %428 = vmatpush2.msra.mxu0 0.0
    %429 = vmatprep.subr.mxu0 0.0
    %430 = vmatpush2.msra.mxu0 0.0
    %431 = vmatprep.subr.mxu0 0.0
    %432 = vmatpush2.msra.mxu0 0.0
    %433 = vmatprep.subr.mxu0 0.0
    %434 = vmatpush2.msra.mxu0 0.0
    %435 = vmatprep.subr.mxu0 0.0
    %436 = vmatpush2.msra.mxu0 0.0
    %437 = vmatprep.subr.mxu0 0.0
    %438 = vmatpush2.msra.mxu0 0.0
    %439 = vmatprep.subr.mxu0 0.0
    %440 = vmatpush2.msra.mxu0 0.0
    %441 = vmatprep.subr.mxu0 0.0
    %442 = vmatpush2.msra.mxu0 0.0
    %443 = vmatprep.subr.mxu0 0.0
    %444 = vmatpush2.msra.mxu0 0.0
    %445 = vmatprep.subr.mxu0 0.0
    %446 = vmatpush2.msra.mxu0 0.0
    %447 = vmatprep.subr.mxu0 0.0
    %448 = vmatpush2.msra.mxu0 0.0
    %449 = vmatprep.subr.mxu0 0.0
    %450 = vmatpush2.msra.mxu0 0.0
    %451 = vmatprep.subr.mxu0 0.0
    %452 = vmatpush2.msra.mxu0 0.0
    %453 = vmatprep.subr.mxu0 0.0
    %454 = vmatpush2.msra.mxu0 0.0
    %455 = vmatprep.subr.mxu0 0.0
    %456 = vmatpush2.msra.mxu0 0.0
    %457 = vmatprep.subr.mxu0 0.0
    %458 = vmatpush2.msra.mxu0 0.0
    %459 = vmatprep.mubr.f32.mxu0 0.0
    %460 = vmatmul.mubr.f32.gmra.mxu0 %v226
    %v461 = vpop.f32.mrf.mxu0
    %v462 = vadd.f32 %v385, %v461
    %v463 = vpop.f32.mrf.mxu0
    %v464 = vadd.f32 %v387, %v463
    %465 = vdwg.mxu0
    %v466 = vadd.f32 %v462, %v309
    %v467 = vadd.f32 %v464, %v309
    %s468 = scalar_lea.vmem [#allocation7], 16
    %469 = vst [vmem:[%s468] sm:$0xff] %v466
    %470 = vst [vmem:[%s468 + $0x8] sm:$0xff] %v467
    // Predicated region
    $region34: #{tpu_custom_call.1} parent=1 // pred_check
      _
    $region35: #{tpu_custom_call.1} parent=1 // pred_check_branch
      %472 = sbr.rel (0) target = $region37
    $region36: #{tpu_custom_call.1} parent=1 // pred_region
      %s474 = ssub.s32 512, 512
      %475 = vsyncadd [#allocation4], %s474
      %s476 = sshll.u32 [#allocation7], 4
      %s477 = int_to_ptr.vmem [resolvable:$true] %s476
      %482 = dma.vmem_to_hbm [thread:$0]  %s477, 512, %s6, [#allocation4], 256, 256, 16
    $region37: #{tpu_custom_call.1} parent=1 // pred_fallthru
      _
    // Predicated region
    $region38: #{tpu_custom_call.1} parent=1 // pred_check
      _
    $region39: #{tpu_custom_call.1} parent=1 // pred_check_branch
      %484 = sbr.rel (0) target = $region41
    $region40: #{tpu_custom_call.1} parent=1 // pred_region
      %485 = dma.done [#allocation4], 512
    $region41: #{tpu_custom_call.1} parent=1 // pred_fallthru
      _
    %486 = vsyncpa [#allocation3], 1
    %487 = vsyncpa [#allocation6], 1
    %488 = vsyncpa [#allocation4], 1

</llo_original>
